<compile_context>
chip_gen: v7x
topology: tpu7x:2x2x1
jax: 0.10.0
libtpu: 0.0.40
codegen_flags: <defaults>
</compile_context>

<pallas_src>
import jax
import jax.numpy as jnp
from jax.experimental import pallas as pl
from jax.experimental.pallas import tpu as pltpu


def _round_up(x, m):
    return (x + m - 1) // m * m


def patch_embed_kernel(x_ref, w_ref, add_ref, out_ref):
    # x_ref:   (tm, K)      bf16  flattened patch rows (cls/pad rows are zero)
    # w_ref:   (K, E_pad)   bf16  conv weight, reshaped + transposed + padded
    # add_ref: (tm, E_pad)  f32   per-row additive term (cls+pos / bias+pos)
    # out_ref: (tm, E_pad)  f32
    acc = jnp.dot(x_ref[...], w_ref[...], preferred_element_type=jnp.float32)
    out_ref[...] = (acc + add_ref[...]).astype(out_ref.dtype)


def patch_embedding_forward(x, conv_w, conv_b, cls_token, positions, patch_size):
    """x: (B, C, H, W) float32. Returns (B, N+1, E) float32."""
    B, C, H, W = x.shape
    P = patch_size
    E = conv_w.shape[0]
    nh, nw = H // P, W // P
    N = nh * nw
    K = C * P * P
    N1 = N + 1

    # ---- tile plan -------------------------------------------------------
    target_tm = 128                       # natural MXU row granule (v5e/v6e/v7x)
    if N1 <= target_tm:
        Np = _round_up(N1, 16)            # 16: bf16 sublane packing granule
        tm = Np                           # one row-tile per batch element
    else:
        Np = _round_up(N1, target_tm)
        tm = target_tm
    tiles_per_batch = Np // tm
    E_pad = _round_up(E, 128)             # lane-dense output stores

    # ---- glue (plain JAX): patch extraction + operand packing -------------
    # TODO(synk): for large images, fuse patch extraction into the kernel via a
    # strided-DMA index_map instead of materializing this transposed copy.
    # (B, C, nh, P, nw, P) -> (B, nh, nw, C, P, P) -> (B, N, K)
    patches = x.reshape(B, C, nh, P, nw, P)
    patches = jnp.transpose(patches, (0, 2, 4, 1, 3, 5)).reshape(B, N, K)

    # Insert an all-zero row 0 per batch (becomes the cls row after the add)
    # and zero-pad the token axis to Np rows.
    x_rows = jnp.pad(patches, ((0, 0), (1, Np - N1), (0, 0)))
    x_flat = x_rows.reshape(B * Np, K).astype(jnp.bfloat16)

    # Conv weight (E, C, P, P) -> (K, E) -> padded (K, E_pad), bf16.
    w_mat = conv_w.reshape(E, K).T
    w_mat = jnp.pad(w_mat, ((0, 0), (0, E_pad - E))).astype(jnp.bfloat16)

    # Precomputed additive tensor: row 0 = cls + pos[0]; rows 1..N = bias + pos[1:].
    add_core = jnp.concatenate(
        [cls_token.reshape(1, E) + positions[0:1],
         positions[1:] + conv_b[None, :]], axis=0)            # (N1, E) f32
    add_mat = jnp.pad(add_core, ((0, Np - N1), (0, E_pad - E)))  # (Np, E_pad)

    # ---- Pallas call -------------------------------------------------------
    out_flat = pl.pallas_call(
        patch_embed_kernel,
        out_shape=jax.ShapeDtypeStruct((B * Np, E_pad), jnp.float32),
        grid_spec=pltpu.PrefetchScalarGridSpec(
            num_scalar_prefetch=0,
            grid=(B * tiles_per_batch,),
            in_specs=[
                pl.BlockSpec((tm, K), lambda i: (i, 0)),
                pl.BlockSpec((K, E_pad), lambda i: (0, 0)),
                pl.BlockSpec((tm, E_pad),
                             lambda i: (i % tiles_per_batch, 0)),
            ],
            out_specs=pl.BlockSpec((tm, E_pad), lambda i: (i, 0)),
        ),
        compiler_params=pltpu.CompilerParams(
            dimension_semantics=("parallel",)),
    )(x_flat, w_mat, add_mat)

    # Drop row/lane padding: (B*Np, E_pad) -> (B, N+1, E)
    out = out_flat.reshape(B, Np, E_pad)[:, :N1, :E]
    return out


if __name__ == "__main__":
    # Small shapes consistent with the PyTorch module defaults
    # (emb_size reduced from 768 to 32 for a quick test).
    in_channels = 1
    patch_size = 4
    emb_size = 32
    img_size = 28
    batch = 2

    nh = nw = img_size // patch_size
    N = nh * nw  # 49 patches

    key = jax.random.PRNGKey(0)
    k_x, k_w, k_b, k_cls, k_pos = jax.random.split(key, 5)

    x = jax.random.normal(k_x, (batch, in_channels, img_size, img_size), jnp.float32)
    conv_w = jax.random.normal(
        k_w, (emb_size, in_channels, patch_size, patch_size), jnp.float32) * 0.1
    conv_b = jax.random.normal(k_b, (emb_size,), jnp.float32) * 0.1
    cls_token = jax.random.normal(k_cls, (1, 1, emb_size), jnp.float32)
    positions = jax.random.normal(k_pos, (N + 1, emb_size), jnp.float32)

    out = patch_embedding_forward(x, conv_w, conv_b, cls_token, positions, patch_size)
    out = jax.block_until_ready(out)

    # ---- references --------------------------------------------------------
    patches_ref = x.reshape(batch, in_channels, nh, patch_size, nw, patch_size)
    patches_ref = jnp.transpose(patches_ref, (0, 2, 4, 1, 3, 5)).reshape(batch, N, -1)
    w_ref = conv_w.reshape(emb_size, -1).T
    cls_b = jnp.broadcast_to(cls_token.reshape(1, 1, emb_size), (batch, 1, emb_size))

    # (a) bf16-operand reference (same operand precision as the kernel, f32 accumulate)
    proj_bf16 = jnp.dot(patches_ref.astype(jnp.bfloat16), w_ref.astype(jnp.bfloat16),
                        preferred_element_type=jnp.float32) + conv_b
    ref_bf16 = jnp.concatenate([cls_b, proj_bf16], axis=1) + positions

    # (b) full-f32 reference (original module numerics)
    proj_f32 = patches_ref @ w_ref + conv_b
    ref_f32 = jnp.concatenate([cls_b, proj_f32], axis=1) + positions

    assert out.shape == (batch, N + 1, emb_size)
    assert jnp.allclose(out, ref_bf16, atol=1e-4, rtol=1e-4)
    assert jnp.allclose(out, ref_f32, atol=3e-2, rtol=3e-2)
    print("KERNEL_OK")
</pallas_src>

<mosaic_0001>
module attributes {stable_mosaic.version = 11 : i64} {
  func.func @patch_embed_kernel(%arg0: i32, %arg1: memref<64x16xbf16, #tpu.memory_space<vmem>>, %arg2: memref<16x128xbf16, #tpu.memory_space<vmem>>, %arg3: memref<64x128xf32, #tpu.memory_space<vmem>>, %arg4: memref<64x128xf32, #tpu.memory_space<vmem>>) attributes {dimension_semantics = [#tpu.dimension_semantics<parallel>], iteration_bounds = array<i64: 2>, scalar_prefetch = 0 : i64, scratch_operands = 0 : i64, tpu.core_type = #tpu.core_type<tc>, window_params = [{transform_indices = @transform_0, window_bounds = array<i64: 64, 16>}, {pipeline_mode = #tpu.pipeline_mode<synchronous>, transform_indices = @transform_1, window_bounds = array<i64: 16, 128>}, {transform_indices = @transform_2, window_bounds = array<i64: 64, 128>}, {transform_indices = @transform_3, window_bounds = array<i64: 64, 128>}]} {
    %c0 = arith.constant 0 : index
    %c0_0 = arith.constant 0 : index
    %0 = vector.load %arg1[%c0, %c0_0] : memref<64x16xbf16, #tpu.memory_space<vmem>>, vector<64x16xbf16>
    %c0_1 = arith.constant 0 : index
    %c0_2 = arith.constant 0 : index
    %1 = vector.load %arg2[%c0_1, %c0_2] : memref<16x128xbf16, #tpu.memory_space<vmem>>, vector<16x128xbf16>
    %cst = arith.constant dense<0.000000e+00> : vector<64x128xf32>
    %2 = tpu.matmul %0, %1, %cst {dimension_numbers = #tpu.dot_dimension_numbers<[1], [0], [0], [1], [0, 0, 1, 1], [], []>} : vector<64x16xbf16>, vector<16x128xbf16>, vector<64x128xf32> -> vector<64x128xf32>
    %c0_3 = arith.constant 0 : index
    %c0_4 = arith.constant 0 : index
    %3 = vector.load %arg3[%c0_3, %c0_4] : memref<64x128xf32, #tpu.memory_space<vmem>>, vector<64x128xf32>
    %4 = arith.addf %2, %3 : vector<64x128xf32>
    %c0_5 = arith.constant 0 : index
    %c0_6 = arith.constant 0 : index
    %5 = vector.load %arg4[%c0_5, %c0_6] : memref<64x128xf32, #tpu.memory_space<vmem>>, vector<64x128xf32>
    tpu.vector_store %arg4[%c0_5, %c0_6], %4 {strides = array<i32>} : memref<64x128xf32, #tpu.memory_space<vmem>>, vector<64x128xf32>,
    return
  }
  func.func @transform_0(%arg0: i32) -> (i32, i32) {
    %c0_i32 = arith.constant 0 : i32
    %c0_i32_0 = arith.constant 0 : i32
    return %arg0, %c0_i32 : i32, i32
  }
  func.func @transform_1(%arg0: i32) -> (i32, i32) {
    %c0_i32 = arith.constant 0 : i32
    %c0_i32_0 = arith.constant 0 : i32
    %c0_i32_1 = arith.constant 0 : i32
    return %c0_i32, %c0_i32_0 : i32, i32
  }
  func.func @transform_2(%arg0: i32) -> (i32, i32) {
    %c1_i32 = arith.constant 1 : i32
    %c0_i32 = arith.constant 0 : i32
    %0 = arith.cmpi eq, %c1_i32, %c0_i32 : i32
    %c1_i32_0 = arith.constant 1 : i32
    %1 = arith.select %0, %c1_i32_0, %c1_i32 : i32
    %2 = arith.remsi %arg0, %1 : i32
    %c0_i32_1 = arith.constant 0 : i32
    %3 = arith.cmpi ne, %2, %c0_i32_1 : i32
    %c0_i32_2 = arith.constant 0 : i32
    %4 = arith.cmpi slt, %2, %c0_i32_2 : i32
    %c0_i32_3 = arith.constant 0 : i32
    %5 = arith.cmpi slt, %1, %c0_i32_3 : i32
    %6 = arith.xori %4, %5 : i1
    %7 = arith.andi %6, %3 : i1
    %8 = arith.addi %2, %1 : i32
    %9 = arith.select %7, %8, %2 : i32
    %c0_i32_4 = arith.constant 0 : i32
    %c0_i32_5 = arith.constant 0 : i32
    return %9, %c0_i32_4 : i32, i32
  }
  func.func @transform_3(%arg0: i32) -> (i32, i32) {
    %c0_i32 = arith.constant 0 : i32
    %c0_i32_0 = arith.constant 0 : i32
    return %arg0, %c0_i32 : i32, i32
  }
}

</mosaic_0001>

<llo_original>
// kernel: tpu_custom_call.1
$region0: #{tpu_custom_call.1}
  #allocation0 [shape = 'u32[]', space=smem, size = 0x4, offset = 0x4, fixed_abs, tag = 'smem constant byte address 0x4 - core index']
  #allocation1 [shape = 'u32[144,128]{1,0:T(1,128)}', space=vmem, size = 0x12000, scoped, tag = 'internal scratch']
  %s0 = inlined_call_operand.vmem [shape: bf16[128,16], index: 0, kind: input, shape index: {}]
  %s1 = inlined_call_operand.vmem [shape: bf16[16,128], index: 1, kind: input, shape index: {}]
  %s2 = inlined_call_operand.vmem [shape: f32[64,128], index: 2, kind: input, shape index: {}]
  %s3 = inlined_call_operand.hbm [shape: f32[128,128], index: 3, kind: output, shape index: {}]
  %s4 = sld [smem:[#allocation0]]
  $region45: #{tpu_custom_call.1} parent=0
    _
  %s6 = ssub.s32 1, %s4
  %s7 = scalar_select 0, %s6, %s4
  $region1: #{tpu_custom_call.1} parent=0
    #allocation2 [shape = 'u8[65536]{0}', space=vmem, size = 0x10000, scoped, tag = 'output window, operand 0']
    #allocation3 [shape = 's32[2]{0}', space=sflag, size = 0x8, scoped, tag = 'scoped memory for tpu_custom_call.1']
    %8 = vsyncpa [#allocation3], 0
    %s9 = scalar_lea.sflag [#allocation3], 1
    %10 = vsyncpa %s9, 0
    loop: start=0, step=1, limit=4
    $region2: #{tpu_custom_call.1} parent=1 // loop_pre_header
      _
    $region3: #{tpu_custom_call.1} parent=1 // loop_header
      %s12 = sphi 0, %s16
      %p13 = scmp.ge.s32.totalorder %s12, 4
      %s22 = sphi 0, %s24
      %s25 = sphi 0, %s22
      %s26 = sphi 0, %s25
      %s42 = sphi 0, %s26
      %s46 = sphi 0, %s46
      %s48 = sphi 0, %s46
      %s49 = sphi 0, %s48
      %s63 = sphi 0, %s49
      %s67 = sphi 0, %s67
      %s69 = sphi 0, %s67
      %s70 = sphi 0, %s69
      %s84 = sphi 0, %s70
      %s90 = sphi 0, %s92
      %s93 = sphi 0, %s90
      %s94 = sphi 0, %s93
      %s110 = sphi 0, %s94
    $region4: #{tpu_custom_call.1} parent=1 // loop_header_branch
      %15 = sbr.rel (%p13) target = $region8
    $region5: #{tpu_custom_call.1} parent=1 // loop_body
      %s17 = ssub.s32 %s12, 1
      %s18 = ssub.s32 %s12, 2
      %s19 = sadd.s32 %s12, 1
      %s20 = ssub.s32 %s12, %s19
      %p21 = scmp.eq.s32.totalorder %s20, 0
      %s23 = sadd.s32 %s22, 1
      %s24 = scalar_select %p21, %s22, %s23
      %p27 = pneg %p21
      %p28 = scmp.eq.s32.totalorder %s12, 1
      %p29 = por %p27, %p28
      %p30 = scmp.ne.s32.totalorder %s22, %s25
      %p31 = scmp.eq.s32.totalorder %s12, 0
      %p32 = por %p30, %p31
      %p33 = scmp.ne.s32.totalorder %s22, %s25
      %p34 = scmp.eq.s32.totalorder %s17, 1
      %p35 = por %p33, %p34
      %p36 = scmp.ne.s32.totalorder %s25, %s26
      %p37 = scmp.eq.s32.totalorder %s17, 0
      %p38 = por %p36, %p37
      %p39 = scmp.ne.s32.totalorder %s25, %s26
      %p40 = scmp.eq.s32.totalorder %s18, 1
      %p41 = por %p39, %p40
      %p43 = scmp.ne.s32.totalorder %s26, %s42
      %p44 = scmp.eq.s32.totalorder %s18, 0
      %p45 = por %p43, %p44
      %s47 = sadd.s32 %s46, 1
      %p50 = scmp.eq.s32.totalorder %s12, 1
      %p51 = scmp.ne.s32.totalorder %s46, %s48
      %p52 = scmp.eq.s32.totalorder %s12, 0
      %p53 = por %p51, %p52
      %p54 = scmp.ne.s32.totalorder %s46, %s48
      %p55 = scmp.eq.s32.totalorder %s17, 1
      %p56 = por %p54, %p55
      %p57 = scmp.ne.s32.totalorder %s48, %s49
      %p58 = scmp.eq.s32.totalorder %s17, 0
      %p59 = por %p57, %p58
      %p60 = scmp.ne.s32.totalorder %s48, %s49
      %p61 = scmp.eq.s32.totalorder %s18, 1
      %p62 = por %p60, %p61
      %p64 = scmp.ne.s32.totalorder %s49, %s63
      %p65 = scmp.eq.s32.totalorder %s18, 0
      %p66 = por %p64, %p65
      %s68 = sadd.s32 %s67, 1
      %p71 = scmp.eq.s32.totalorder %s12, 1
      %p72 = scmp.ne.s32.totalorder %s67, %s69
      %p73 = scmp.eq.s32.totalorder %s12, 0
      %p74 = por %p72, %p73
      %p75 = scmp.ne.s32.totalorder %s67, %s69
      %p76 = scmp.eq.s32.totalorder %s17, 1
      %p77 = por %p75, %p76
      %p78 = scmp.ne.s32.totalorder %s69, %s70
      %p79 = scmp.eq.s32.totalorder %s17, 0
      %p80 = por %p78, %p79
      %p81 = scmp.ne.s32.totalorder %s69, %s70
      %p82 = scmp.eq.s32.totalorder %s18, 1
      %p83 = por %p81, %p82
      %p85 = scmp.ne.s32.totalorder %s70, %s84
      %p86 = scmp.eq.s32.totalorder %s18, 0
      %p87 = por %p85, %p86
      %s88 = ssub.s32 %s12, %s19
      %p89 = scmp.eq.s32.totalorder %s88, 0
      %s91 = sadd.s32 %s90, 1
      %s92 = scalar_select %p89, %s90, %s91
      %p95 = pneg %p89
      %p96 = scmp.eq.s32.totalorder %s12, 1
      %p97 = por %p95, %p96
      %p98 = scmp.ne.s32.totalorder %s90, %s93
      %p99 = scmp.eq.s32.totalorder %s12, 0
      %p100 = por %p98, %p99
      %p101 = scmp.ne.s32.totalorder %s90, %s93
      %p102 = scmp.eq.s32.totalorder %s17, 1
      %p103 = por %p101, %p102
      %p104 = scmp.ne.s32.totalorder %s93, %s94
      %p105 = scmp.eq.s32.totalorder %s17, 0
      %p106 = por %p104, %p105
      %p107 = scmp.ne.s32.totalorder %s93, %s94
      %p108 = scmp.eq.s32.totalorder %s18, 1
      %p109 = por %p107, %p108
      %p111 = scmp.ne.s32.totalorder %s94, %s110
      %p112 = scmp.eq.s32.totalorder %s18, 0
      %p113 = por %p111, %p112
      %p114 = scmp.le.s32.totalorder 1, %s12
      %p115 = scmp.lt.s32.totalorder %s12, 3
      %p116 = pnand %p114, %p115
      %p117 = pneg %p116
      // Predicated region
      $region9: #{tpu_custom_call.1} parent=5 // pred_check
        _
      $region10: #{tpu_custom_call.1} parent=5 // pred_check_branch
        %119 = sbr.rel (%p116) target = $region12
      $region11: #{tpu_custom_call.1} parent=5 // pred_region
        %s120 = ssub.s32 %s12, 1
        // Predicated region
        $region13: #{tpu_custom_call.1} parent=11 // pred_check
          %p121 = pneg %p59
        $region14: #{tpu_custom_call.1} parent=11 // pred_check_branch
          %123 = sbr.rel (%p121) target = $region16
        $region15: #{tpu_custom_call.1} parent=11 // pred_region
          _
        $region16: #{tpu_custom_call.1} parent=11 // pred_fallthru
          _
        // Predicated region
        $region17: #{tpu_custom_call.1} parent=11 // pred_check
          %p124 = pneg %p80
        $region18: #{tpu_custom_call.1} parent=11 // pred_check_branch
          %126 = sbr.rel (%p124) target = $region20
        $region19: #{tpu_custom_call.1} parent=11 // pred_region
          _
        $region20: #{tpu_custom_call.1} parent=11 // pred_fallthru
          _
      $region12: #{tpu_custom_call.1} parent=5 // pred_fallthru
        _
      %p127 = scmp.lt.s32.totalorder %s12, 2
      // Predicated region
      $region21: #{tpu_custom_call.1} parent=5 // pred_check
        %p128 = pneg %p127
      $region22: #{tpu_custom_call.1} parent=5 // pred_check_branch
        %130 = sbr.rel (%p128) target = $region24
      $region23: #{tpu_custom_call.1} parent=5 // pred_region
        // Predicated region
        $region25: #{tpu_custom_call.1} parent=23 // pred_check
          %p131 = pneg %p32
        $region26: #{tpu_custom_call.1} parent=23 // pred_check_branch
          %133 = sbr.rel (%p131) target = $region28
        $region27: #{tpu_custom_call.1} parent=23 // pred_region
          %s134 = smul.u32 8, %s12
          %p135 = scmp.lt.s32.totalorder %s134, 15
          %s136 = scalar_select %p135, %s134, 15
          %s137 = smul.addr %s136, 4
          %s138 = scalar_lea.vmem %s0, %s137
          %s139 = smul.u32 8, %s12
        $region28: #{tpu_custom_call.1} parent=23 // pred_fallthru
          _
      $region24: #{tpu_custom_call.1} parent=5 // pred_fallthru
        _
      %p140 = scmp.le.s32.totalorder 1, %s12
      %p141 = scmp.lt.s32.totalorder %s12, 3
      %p142 = pnand %p140, %p141
      %p143 = pneg %p142
      // Predicated region
      $region29: #{tpu_custom_call.1} parent=5 // pred_check
        _
      $region30: #{tpu_custom_call.1} parent=5 // pred_check_branch
        %145 = sbr.rel (%p142) target = $region32
      $region31: #{tpu_custom_call.1} parent=5 // pred_region
        %s146 = ssub.s32 %s12, 1
        %s147 = smul.u32 8, %s17
        %p148 = scmp.lt.s32.totalorder %s147, 15
        %s149 = scalar_select %p148, %s147, 15
        %s150 = smul.addr %s149, 4
        %s151 = scalar_lea.vmem %s0, %s150
        %p152 = pneg %p38
        %p153 = pneg %p35
        %p154 = pneg %p59
        %p155 = pneg %p56
        %p156 = pneg %p80
        %p157 = pneg %p77
        %p158 = pneg %p106
        %p159 = pneg %p103
        %s160 = sand.u32 %s93, 1
        %s161 = scalar_lea.sflag [#allocation3], %s160
        %s162 = sand.u32 %s93, 1
        %s163 = smul.addr %s162, 64
        %s164 = scalar_lea.vmem [#allocation2], %s163
        %s165 = smul.u32 8, %s17
        %p166 = scmp.lt.s32.totalorder %s165, 15
        %s167 = scalar_select %p166, %s165, 15
        %s168 = smul.addr %s167, 4
        %s169 = scalar_lea.vmem %s0, %s168
        %s170 = smul.u32 8, %s17
        %s171 = smul.u32 8, %s17
        %v173 = vld [vmem:[%s169] sm:$0xf]
        %v174 = vld [vmem:[%s169 + $0x4] sm:$0xf]
        %v175 = vld [vmem:[%s169 + $0x8] sm:$0xf]
        %v176 = vld [vmem:[%s169 + $0xc] sm:$0xf]
        %v177 = vld [vmem:[%s169 + $0x10] sm:$0xf]
        %v178 = vld [vmem:[%s169 + $0x14] sm:$0xf]
        %v179 = vld [vmem:[%s169 + $0x18] sm:$0xf]
        %v180 = vld [vmem:[%s169 + $0x1c] sm:$0xf]
        %v181 = vld [vmem:[%s1] sm:$0xf]
        %v182 = vld [vmem:[%s1 + $0x4] sm:$0xf]
        %v183 = vld [vmem:[%s2] sm:$0xff]
        %v184 = vld [vmem:[%s2 + $0x8] sm:$0xff]
        %v185 = vld [vmem:[%s2 + $0x10] sm:$0xff]
        %v186 = vld [vmem:[%s2 + $0x18] sm:$0xff]
        %v187 = vld [vmem:[%s2 + $0x20] sm:$0xff]
        %v188 = vld [vmem:[%s2 + $0x28] sm:$0xff]
        %v189 = vld [vmem:[%s2 + $0x30] sm:$0xff]
        %v190 = vld [vmem:[%s2 + $0x38] sm:$0xff]
        %v199 = vunpack.c.l.b16 %v173
        %v200 = vunpack.c.l.b16 %v174
        %v201 = vunpack.c.l.b16 %v175
        %v202 = vunpack.c.l.b16 %v176
        %v203 = vunpack.c.l.b16 %v177
        %v204 = vunpack.c.l.b16 %v178
        %v205 = vunpack.c.l.b16 %v179
        %v206 = vunpack.c.l.b16 %v180
        %v207 = vpack.c.b16 %v200, %v199
        %v208 = vpack.c.b16 %v202, %v201
        %v209 = vpack.c.b16 %v204, %v203
        %v210 = vpack.c.b16 %v206, %v205
        %v213 = vunpack.c.l.b16 %v181
        %v214 = vunpack.c.l.b16 %v182
        %v215 = vpack.c.b16 %v214, %v213
        %vm217 = vcmask 130048
        %v219 = vsel %vm217, %v207, 0
        %v222 = vsel %vm217, %v208, 0
        %v225 = vsel %vm217, %v209, 0
        %v228 = vsel %vm217, %v210, 0
        %230 = vmatprep.subr.bf16.mxu0 0
        %231 = vmatpush1.bf16.msra.mxu0 %v215
        %232 = vmatprep.subr.bf16.mxu0 0
        %233 = vmatpush1.bf16.msra.mxu0 0
        %234 = vmatprep.subr.bf16.mxu0 0
        %235 = vmatpush1.bf16.msra.mxu0 0
        %236 = vmatprep.subr.bf16.mxu0 0
        %237 = vmatpush1.bf16.msra.mxu0 0
        %238 = vmatprep.subr.bf16.mxu0 0
        %239 = vmatpush1.bf16.msra.mxu0 0
        %240 = vmatprep.subr.bf16.mxu0 0
        %241 = vmatpush1.bf16.msra.mxu0 0
        %242 = vmatprep.subr.bf16.mxu0 0
        %243 = vmatpush1.bf16.msra.mxu0 0
        %244 = vmatprep.subr.bf16.mxu0 0
        %245 = vmatpush1.bf16.msra.mxu0 0
        %246 = vmatprep.subr.bf16.mxu0 0
        %247 = vmatpush1.bf16.msra.mxu0 0
        %248 = vmatprep.subr.bf16.mxu0 0
        %249 = vmatpush1.bf16.msra.mxu0 0
        %250 = vmatprep.subr.bf16.mxu0 0
        %251 = vmatpush1.bf16.msra.mxu0 0
        %252 = vmatprep.subr.bf16.mxu0 0
        %253 = vmatpush1.bf16.msra.mxu0 0
        %254 = vmatprep.subr.bf16.mxu0 0
        %255 = vmatpush1.bf16.msra.mxu0 0
        %256 = vmatprep.subr.bf16.mxu0 0
        %257 = vmatpush1.bf16.msra.mxu0 0
        %258 = vmatprep.subr.bf16.mxu0 0
        %259 = vmatpush1.bf16.msra.mxu0 0
        %260 = vmatprep.subr.bf16.mxu0 0
        %261 = vmatpush1.bf16.msra.mxu0 0
        %262 = vmatprep.mubr.bf16.mxu0 0
        %263 = vmatmul.mubr.bf16.gmra.mrb[0].mxu0 %v219
        %v264 = vpop.f32.mrb[0].mxu0
        %v265 = vadd.f32 %v183, %v264
        %v266 = vpop.f32.mrb[0].mxu0
        %v267 = vpop.f32.mrb[0].mxu0
        %v268 = vadd.f32 %v184, %v267
        %v269 = vpop.f32.mrb[0].mxu0
        %270 = vmatprep.mubr.bf16.mxu0 0
        %271 = vmatmul.mubr.bf16.gmra.mrb[0].mxu0 %v222
        %v272 = vpop.f32.mrb[0].mxu0
        %v273 = vadd.f32 %v185, %v272
        %v274 = vpop.f32.mrb[0].mxu0
        %v275 = vpop.f32.mrb[0].mxu0
        %v276 = vadd.f32 %v186, %v275
        %v277 = vpop.f32.mrb[0].mxu0
        %278 = vmatprep.mubr.bf16.mxu0 0
        %279 = vmatmul.mubr.bf16.gmra.mrb[0].mxu0 %v225
        %v280 = vpop.f32.mrb[0].mxu0
        %v281 = vadd.f32 %v187, %v280
        %v282 = vpop.f32.mrb[0].mxu0
        %v283 = vpop.f32.mrb[0].mxu0
        %v284 = vadd.f32 %v188, %v283
        %v285 = vpop.f32.mrb[0].mxu0
        %286 = vmatprep.mubr.bf16.mxu0 0
        %287 = vmatmul.mubr.bf16.gmra.mrb[0].mxu0 %v228
        %v288 = vpop.f32.mrb[0].mxu0
        %v289 = vadd.f32 %v189, %v288
        %v290 = vpop.f32.mrb[0].mxu0
        %v291 = vpop.f32.mrb[0].mxu0
        %v292 = vadd.f32 %v190, %v291
        %v293 = vpop.f32.mrb[0].mxu0
        %294 = vdwg.mxu0
        %295 = vst [vmem:[%s164] sm:$0xff] %v265
        %296 = vst [vmem:[%s164 + $0x8] sm:$0xff] %v268
        %297 = vst [vmem:[%s164 + $0x10] sm:$0xff] %v273
        %298 = vst [vmem:[%s164 + $0x18] sm:$0xff] %v276
        %299 = vst [vmem:[%s164 + $0x20] sm:$0xff] %v281
        %300 = vst [vmem:[%s164 + $0x28] sm:$0xff] %v284
        %301 = vst [vmem:[%s164 + $0x30] sm:$0xff] %v289
        %302 = vst [vmem:[%s164 + $0x38] sm:$0xff] %v292
        %s303 = sand.u32 %s93, 1
        %s304 = scalar_lea.sflag [#allocation3], %s303
        %s305 = sand.u32 %s93, 1
        %s306 = smul.addr %s305, 64
        %s307 = scalar_lea.vmem [#allocation2], %s306
        // Predicated region
        $region33: #{tpu_custom_call.1} parent=31 // pred_check
          %p308 = pneg %p103
        $region34: #{tpu_custom_call.1} parent=31 // pred_check_branch
          %310 = sbr.rel (%p308) target = $region36
        $region35: #{tpu_custom_call.1} parent=31 // pred_region
          %s311 = smul.u32 8, %s17
          %s313 = ssub.s32 1024, 1024
          %314 = vsyncadd %s304, %s313
          %s315 = smul.addr %s311, 128
          %s316 = scalar_lea.hbm %s3, %s315
          %s317 = sshll.u32 %s307, 4
          %s318 = int_to_ptr.vmem [resolvable:$true] %s317
          %323 = dma.vmem_to_hbm [thread:$0]  %s318, 1024, %s316, %s304, 128, 128, 8
        $region36: #{tpu_custom_call.1} parent=31 // pred_fallthru
          _
      $region32: #{tpu_custom_call.1} parent=5 // pred_fallthru
        _
      %p324 = scmp.le.s32.totalorder 2, %s12
      // Predicated region
      $region37: #{tpu_custom_call.1} parent=5 // pred_check
        %p325 = pneg %p324
      $region38: #{tpu_custom_call.1} parent=5 // pred_check_branch
        %327 = sbr.rel (%p325) target = $region40
      $region39: #{tpu_custom_call.1} parent=5 // pred_region
        %s328 = ssub.s32 %s12, 2
        // Predicated region
        $region41: #{tpu_custom_call.1} parent=39 // pred_check
          %p329 = pneg %p109
        $region42: #{tpu_custom_call.1} parent=39 // pred_check_branch
          %331 = sbr.rel (%p329) target = $region44
        $region43: #{tpu_custom_call.1} parent=39 // pred_region
          %s332 = sand.u32 %s94, 1
          %s333 = scalar_lea.sflag [#allocation3], %s332
          %s334 = sand.u32 %s94, 1
          %s335 = smul.addr %s334, 64
          %s336 = scalar_lea.vmem [#allocation2], %s335
          %337 = dma.done %s333, 1024
        $region44: #{tpu_custom_call.1} parent=39 // pred_fallthru
          _
      $region40: #{tpu_custom_call.1} parent=5 // pred_fallthru
        _
    $region6: #{tpu_custom_call.1} parent=1 // loop_footer
      %s16 = sadd.s32 1, %s12
    $region7: #{tpu_custom_call.1} parent=1 // loop_footer_branch
      %11 = sbr.rel target = $region3
    $region8: #{tpu_custom_call.1} parent=1 // loop_exit
      _
    %338 = vsyncpa [#allocation3], 1
    %s339 = scalar_lea.sflag [#allocation3], 1
    %340 = vsyncpa %s339, 1

</llo_original>
